<compile_context>
chip_gen: v7x
topology: tpu7x:2x2x1
jax: 0.10.0
libtpu: 0.0.40
codegen_flags: <defaults>
</compile_context>

<pallas_src>
import jax
import jax.numpy as jnp
from jax.experimental import pallas as pl
from jax.experimental.pallas import tpu as pltpu

SCALE = 1.67653251702


def _silu_kernel(x_ref, o_ref):
    # Upcast to f32: kernel is HBM-bound with huge VPU/EUP slack, and this keeps
    # the scale constant / sigmoid exact for sub-32-bit inputs.
    x = x_ref[...].astype(jnp.float32)
    o_ref[...] = (SCALE * x * jax.nn.sigmoid(x)).astype(o_ref.dtype)


def _cdiv(a, b):
    return -(-a // b)


def _round_up(a, b):
    return _cdiv(a, b) * b


def _chip_info():
    """(multi_tc, target_block_bytes) with safe fallbacks."""
    kind = ""
    try:
        kind = jax.devices()[0].device_kind.lower()
    except Exception:
        pass
    # Chips that expose 2 TensorCores to one Pallas call (megacore): v4, v5p, v7x.
    multi_tc = any(t in kind for t in ("v4", "v5p", "7"))
    if multi_tc or "v6" in kind:
        target = 6 * 1024 * 1024   # higher HBM BW -> amortize per-step overhead more
    else:
        target = 4 * 1024 * 1024
    return multi_tc, target


def _num_blocks(total_bytes, target_block_bytes, multi_tc):
    steps = max(1, _cdiv(total_bytes, target_block_bytes))
    if multi_tc and total_bytes >= (1 << 20):
        # >=2 steps per TensorCore and an even count so both cores get equal work.
        steps = max(steps, 4)
        steps += steps % 2
    return steps


def _vmem_limit(block_bytes):
    # in + out, double-buffered, plus margin for Mosaic internal scratch.
    limit = 4 * block_bytes + 8 * 1024 * 1024
    limit = max(limit, 24 * 1024 * 1024)
    limit = min(limit, 32 * 1024 * 1024)
    try:
        limit = min(limit, pltpu.get_tpu_info().vmem_capacity_bytes // 2)
    except Exception:
        pass
    return limit


def scaled_silu(x):
    """y = 1.67653251702 * x * sigmoid(x), elementwise, via a Pallas TPU kernel."""
    orig_shape = x.shape
    if not jnp.issubdtype(x.dtype, jnp.floating):
        x = x.astype(jnp.float32)          # sigmoid on non-floats: promote explicitly
    dtype = x.dtype
    n = x.size
    if n == 0:
        return jnp.reshape(x, orig_shape)

    itemsize = jnp.dtype(dtype).itemsize
    sublane = {4: 8, 2: 16, 1: 32}.get(itemsize, 8)
    multi_tc, target_block_bytes = _chip_info()

    if n % 128 == 0:
        # ---------- aligned path: lane-dense (rows, W) slab, zero-copy reshape ----
        W = None
        for cand in (1024, 512, 256, 128):       # widest W with sublane-aligned rows
            if n % cand == 0 and (n // cand) % sublane == 0:
                W = cand
                break
        if W is None:
            for cand in (1024, 512, 256, 128):   # widest W that divides n
                if n % cand == 0:
                    W = cand
                    break
        rows = n // W
        x2d = jnp.reshape(x, (rows, W))

        if rows <= sublane:
            tr = rows                            # full-height block, always legal/dense
        else:
            steps = _num_blocks(rows * W * itemsize, target_block_bytes, multi_tc)
            tr = _round_up(_cdiv(rows, steps), sublane)
            tr = min(tr, _round_up(rows, sublane))
        grid = (_cdiv(rows, tr),)
        block_bytes = tr * W * itemsize

        out2d = pl.pallas_call(
            _silu_kernel,
            out_shape=jax.ShapeDtypeStruct((rows, W), dtype),
            grid_spec=pltpu.PrefetchScalarGridSpec(
                num_scalar_prefetch=0,
                grid=grid,
                in_specs=[pl.BlockSpec((tr, W), lambda i: (i, 0))],
                out_specs=pl.BlockSpec((tr, W), lambda i: (i, 0)),
            ),
            compiler_params=pltpu.CompilerParams(
                dimension_semantics=("parallel",),
                vmem_limit_bytes=_vmem_limit(block_bytes),
            ),
        )(x2d)
        return jnp.reshape(out2d, orig_shape)

    # ---------- ragged path: (1, n) slab, no pad / no slice ----------
    # The last block is clipped by Pallas edge masking; HBM traffic stays 2N bytes.
    x2d = jnp.reshape(x, (1, n))
    steps = _num_blocks(n * itemsize, target_block_bytes, multi_tc)
    blk = _round_up(_cdiv(n, steps), 1024)
    blk = min(blk, _round_up(n, 1024))
    grid = (_cdiv(n, blk),)
    block_bytes = blk * itemsize

    out2d = pl.pallas_call(
        _silu_kernel,
        out_shape=jax.ShapeDtypeStruct((1, n), dtype),
        grid_spec=pltpu.PrefetchScalarGridSpec(
            num_scalar_prefetch=0,
            grid=grid,
            in_specs=[pl.BlockSpec((1, blk), lambda j: (0, j))],
            out_specs=pl.BlockSpec((1, blk), lambda j: (0, j)),
        ),
        compiler_params=pltpu.CompilerParams(
            dimension_semantics=("parallel",),
            vmem_limit_bytes=_vmem_limit(block_bytes),
        ),
    )(x2d)
    return jnp.reshape(out2d, orig_shape)


if __name__ == "__main__":
    k0, k1, k2 = jax.random.split(jax.random.PRNGKey(0), 3)

    # NCHW input consistent with typical elementwise module usage (aligned path).
    x = jax.random.normal(k0, (2, 4, 16, 16), dtype=jnp.float32)
    y = jax.block_until_ready(scaled_silu(x))
    y_ref = 1.67653251702 * x * jax.nn.sigmoid(x)
    assert y.shape == x.shape and y.dtype == x.dtype
    assert jnp.allclose(y, y_ref, atol=1e-5, rtol=1e-5)

    # Ragged (non-128-multiple) shape exercises the pad-free, edge-masked path.
    xr = jax.random.normal(k1, (3, 5, 7), dtype=jnp.float32)
    yr = jax.block_until_ready(scaled_silu(xr))
    yr_ref = 1.67653251702 * xr * jax.nn.sigmoid(xr)
    assert yr.shape == xr.shape and yr.dtype == xr.dtype
    assert jnp.allclose(yr, yr_ref, atol=1e-5, rtol=1e-5)

    # bf16 input exercises the f32-internal-math path.
    xb = jax.random.normal(k2, (2, 4, 16, 16), dtype=jnp.bfloat16)
    yb = jax.block_until_ready(scaled_silu(xb))
    xbf = xb.astype(jnp.float32)
    yb_ref = (1.67653251702 * xbf * jax.nn.sigmoid(xbf)).astype(jnp.bfloat16)
    assert yb.dtype == jnp.bfloat16
    assert jnp.allclose(yb.astype(jnp.float32), yb_ref.astype(jnp.float32),
                        atol=2e-2, rtol=2e-2)

    print("KERNEL_OK")
</pallas_src>

<mosaic_0001>
module attributes {stable_mosaic.version = 11 : i64} {
  func.func @_silu_kernel(%arg0: i32, %arg1: memref<8x256xf32, #tpu.memory_space<vmem>>, %arg2: memref<8x256xf32, #tpu.memory_space<vmem>>) attributes {dimension_semantics = [#tpu.dimension_semantics<parallel>], iteration_bounds = array<i64: 1>, scalar_prefetch = 0 : i64, scratch_operands = 0 : i64, tpu.core_type = #tpu.core_type<tc>, window_params = [{transform_indices = @transform_0, window_bounds = array<i64: 8, 256>}, {transform_indices = @transform_1, window_bounds = array<i64: 8, 256>}]} {
    %c0 = arith.constant 0 : index
    %c0_0 = arith.constant 0 : index
    %0 = vector.load %arg1[%c0, %c0_0] : memref<8x256xf32, #tpu.memory_space<vmem>>, vector<8x256xf32>
    %cst = arith.constant 1.67653251 : f32
    %1 = vector.broadcast %cst : f32 to vector<8x256xf32>
    %2 = arith.mulf %1, %0 : vector<8x256xf32>
    %3 = arith.negf %0 : vector<8x256xf32>
    %4 = math.exp %3 : vector<8x256xf32>
    %cst_1 = arith.constant 1.000000e+00 : f32
    %5 = vector.broadcast %cst_1 : f32 to vector<8x256xf32>
    %6 = arith.addf %5, %4 : vector<8x256xf32>
    %7 = arith.divf %5, %6 : vector<8x256xf32>
    %8 = arith.mulf %2, %7 : vector<8x256xf32>
    %c0_2 = arith.constant 0 : index
    %c0_3 = arith.constant 0 : index
    %9 = vector.load %arg2[%c0_2, %c0_3] : memref<8x256xf32, #tpu.memory_space<vmem>>, vector<8x256xf32>
    tpu.vector_store %arg2[%c0_2, %c0_3], %8 {strides = array<i32>} : memref<8x256xf32, #tpu.memory_space<vmem>>, vector<8x256xf32>,
    return
  }
  func.func @transform_0(%arg0: i32) -> (i32, i32) {
    %c0_i32 = arith.constant 0 : i32
    %c0_i32_0 = arith.constant 0 : i32
    return %arg0, %c0_i32 : i32, i32
  }
  func.func @transform_1(%arg0: i32) -> (i32, i32) {
    %c0_i32 = arith.constant 0 : i32
    %c0_i32_0 = arith.constant 0 : i32
    return %arg0, %c0_i32 : i32, i32
  }
}

</mosaic_0001>

<llo_original>
// kernel: tpu_custom_call.1
$region0: #{tpu_custom_call.1}
  #allocation0 [shape = 'u32[]', space=smem, size = 0x4, offset = 0x4, fixed_abs, tag = 'smem constant byte address 0x4 - core index']
  #allocation1 [shape = 'u32[144,128]{1,0:T(1,128)}', space=vmem, size = 0x12000, scoped, tag = 'internal scratch']
  %s0 = inlined_call_operand.hbm [shape: f32[8,256], index: 0, kind: input, shape index: {}]
  %s1 = inlined_call_operand.hbm [shape: f32[8,256], index: 1, kind: output, shape index: {}]
  %s2 = sld [smem:[#allocation0]]
  $region18: #{tpu_custom_call.1} parent=0
    _
  %s4 = ssub.s32 1, %s2
  %s5 = scalar_select 0, %s4, %s2
  $region1: #{tpu_custom_call.1} parent=0
    #allocation2 [shape = 'u8[8192]{0}', space=vmem, size = 0x2000, scoped, tag = 'input window, operand 0, single buffered']
    #allocation3 [shape = 's32[1]{0}', space=sflag, size = 0x4, scoped, tag = 'scoped memory for tpu_custom_call.1']
    #allocation4 [shape = 's32[1]{0}', space=sflag, size = 0x4, scoped, tag = 'scoped memory for tpu_custom_call.1']
    #allocation5 [shape = 'u8[8192]{0}', space=vmem, size = 0x2000, scoped, tag = 'output window, operand 0, single buffered']
    %6 = vsyncpa [#allocation3], 0
    %7 = vsyncpa [#allocation4], 0
    // Predicated region
    $region2: #{tpu_custom_call.1} parent=1 // pred_check
      _
    $region3: #{tpu_custom_call.1} parent=1 // pred_check_branch
      %9 = sbr.rel (0) target = $region5
    $region4: #{tpu_custom_call.1} parent=1 // pred_region
      %s11 = ssub.s32 256, 256
      %12 = vsyncadd [#allocation3], %s11
      %s14 = sshll.u32 [#allocation2], 4
      %s15 = int_to_ptr.vmem [resolvable:$true] %s14
      %17 = dma.hbm_to_vmem [thread:$0]  %s0, 256, %s15, [#allocation3]
    $region5: #{tpu_custom_call.1} parent=1 // pred_fallthru
      _
    // Predicated region
    $region6: #{tpu_custom_call.1} parent=1 // pred_check
      _
    $region7: #{tpu_custom_call.1} parent=1 // pred_check_branch
      %19 = sbr.rel (0) target = $region9
    $region8: #{tpu_custom_call.1} parent=1 // pred_region
      %20 = dma.done [#allocation3], 256
    $region9: #{tpu_custom_call.1} parent=1 // pred_fallthru
      _
    %v21 = vld [vmem:[#allocation2] sm:$0xff]
    %v22 = vld [vmem:[#allocation2 + $0x8] sm:$0xff]
    %v23 = vmul.f32 %v21, 1.6765325
    %v24 = vmul.f32 %v22, 1.6765325
    %v25 = vxor.u32 %v21, 2147483648
    %v26 = vxor.u32 %v22, 2147483648
    %v27 = vmul.f32 %v25, 1.442695
    %v28 = vpow.pop %v27
    %v29 = vmul.f32 %v26, 1.442695
    %v30 = vpow.pop %v29
    %v31 = vadd.f32 %v28, 1.0
    %v32 = vadd.f32 %v30, 1.0
    %v33 = vrcp.pop %v31
    %v34 = vmul.f32 1.0, %v33
    %v35 = vrcp.pop %v32
    %v36 = vmul.f32 1.0, %v35
    %v37 = vmul.f32 %v23, %v34
    %v38 = vmul.f32 %v24, %v36
    %39 = vst [vmem:[#allocation5] sm:$0xff] %v37
    %40 = vst [vmem:[#allocation5 + $0x8] sm:$0xff] %v38
    // Predicated region
    $region10: #{tpu_custom_call.1} parent=1 // pred_check
      _
    $region11: #{tpu_custom_call.1} parent=1 // pred_check_branch
      %42 = sbr.rel (0) target = $region13
    $region12: #{tpu_custom_call.1} parent=1 // pred_region
      %s44 = ssub.s32 256, 256
      %45 = vsyncadd [#allocation4], %s44
      %s47 = sshll.u32 [#allocation5], 4
      %s48 = int_to_ptr.vmem [resolvable:$true] %s47
      %50 = dma.vmem_to_hbm [thread:$0]  %s48, 256, %s1, [#allocation4]
    $region13: #{tpu_custom_call.1} parent=1 // pred_fallthru
      _
    // Predicated region
    $region14: #{tpu_custom_call.1} parent=1 // pred_check
      _
    $region15: #{tpu_custom_call.1} parent=1 // pred_check_branch
      %52 = sbr.rel (0) target = $region17
    $region16: #{tpu_custom_call.1} parent=1 // pred_region
      %53 = dma.done [#allocation4], 256
    $region17: #{tpu_custom_call.1} parent=1 // pred_fallthru
      _
    %54 = vsyncpa [#allocation3], 1
    %55 = vsyncpa [#allocation4], 1

</llo_original>
